<compile_context>
chip_gen: v5e
topology: v5e:2x2
jax: 0.10.0
libtpu: 0.0.40
codegen_flags: <defaults>
</compile_context>

<pallas_src>
import jax
import jax.numpy as jnp
from jax.experimental import pallas as pl
from jax.experimental.pallas import tpu as pltpu


def _round_up(x, m):
    return ((x + m - 1) // m) * m


def _choose_tile(M, tile_m):
    """Pick the row-tile size.

    Small problems use a single full-extent block (block dim == array dim is
    always a legal BlockSpec, even if not 8/128 aligned).  Large problems use
    a lane-aligned tile capped at ceil(M/2) so the 1-D grid always has at
    least two steps (v7x has 2 TensorCores; a 1-step grid idles one of them).
    """
    if M <= 1024:
        return M
    tile = min(tile_m, pl.cdiv(M, 2))
    return _round_up(tile, 128)


def _hawkes_linear_kernel(x_ref, w_ref, b_ref, o_ref):
    # x_ref: (TM, D)  activation tile, native dtype (streamed from HBM)
    # w_ref: (D, NT)  pre-transposed weight in compute dtype (grid-invariant)
    # b_ref: (NT, 1)  f32 bias (grid-invariant, tiny)
    # o_ref: (NT, TM) f32 output tile, transposed -> lane-dense stores
    x = x_ref[...].astype(w_ref.dtype)          # per-tile cast, hidden under DMA
    acc = jax.lax.dot_general(
        w_ref[...], x,
        dimension_numbers=(((0,), (1,)), ((), ())),   # contract over D
        preferred_element_type=jnp.float32,
    )                                                 # -> (NT, TM)
    o_ref[...] = (acc + b_ref[...]).astype(o_ref.dtype)


def hawkes_linear(x_2d, w_t, b_col, *, tile_m=4096):
    """Returns y = x_2d @ w_t + b, shape (M, NT), via a Pallas TPU kernel.

    x_2d : (M, D)   activations (any float dtype; streamed as-is)
    w_t  : (D, NT)  pre-transposed nn.Linear weight (compute dtype)
    b_col: (NT, 1)  bias (float32)
    """
    M, D = x_2d.shape
    Dw, NT = w_t.shape
    assert D == Dw and D % 128 == 0

    tile = _choose_tile(M, tile_m)
    grid = (pl.cdiv(M, tile),)

    cost = pl.CostEstimate(
        flops=2 * M * D * NT,
        transcendentals=0,
        bytes_accessed=(M * D * x_2d.dtype.itemsize
                        + D * NT * w_t.dtype.itemsize
                        + NT * 4
                        + NT * M * 4),
    )

    y_t = pl.pallas_call(
        _hawkes_linear_kernel,
        out_shape=jax.ShapeDtypeStruct((NT, M), jnp.float32),
        grid_spec=pltpu.PrefetchScalarGridSpec(
            num_scalar_prefetch=0,
            grid=grid,
            in_specs=[
                pl.BlockSpec((tile, D), lambda i: (i, 0)),   # streamed activations
                pl.BlockSpec((D, NT), lambda i: (0, 0)),     # full weight (tiny)
                pl.BlockSpec((NT, 1), lambda i: (0, 0)),     # bias
            ],
            out_specs=pl.BlockSpec((NT, tile), lambda i: (0, i)),  # lane-dense
        ),
        compiler_params=pltpu.CompilerParams(
            dimension_semantics=("parallel",),
            vmem_limit_bytes=48 * 1024 * 1024,   # < 64 MiB physical on v7x
        ),
        cost_estimate=cost,
    )(x_2d, w_t, b_col)

    # Back to (M, NT).  NT*M elements -> cheap.
    return jnp.transpose(y_t)


class HawkesPallas:
    """JAX/Pallas counterpart of the PyTorch `hawkes` module."""

    def __init__(self, d_model=768, num_types=1, key=jax.random.PRNGKey(0),
                 compute_dtype=jnp.bfloat16):
        k_w, k_b = jax.random.split(key)
        # Deterministic init mimicking nn.Linear's uniform(-1/sqrt(d), 1/sqrt(d)).
        bound = 1.0 / (d_model ** 0.5)
        # PyTorch weight is (num_types, d_model); store its transpose.
        # compute_dtype=bf16 changes numerics vs. a strict fp32 nn.Linear
        # (accumulation stays f32); pass jnp.float32 for closer fidelity.
        w = jax.random.uniform(k_w, (num_types, d_model), jnp.float32, -bound, bound)
        self.w_t = jnp.transpose(w).astype(compute_dtype)    # (d_model, num_types)
        self.b_col = jax.random.uniform(k_b, (num_types, 1), jnp.float32, -bound, bound)
        self.alpha = jnp.float32(-0.1)   # unused by forward (matches reference)
        self.beta = jnp.float32(1.0)     # unused by forward (matches reference)
        self.d_model = d_model
        self.num_types = num_types

    def linear(self, x, *, tile_m=4096):
        """Apply the module's nn.Linear to x of shape (..., d_model)."""
        lead = x.shape[:-1]
        x_2d = x.reshape(-1, self.d_model)     # native dtype; kernel casts per tile
        y_2d = hawkes_linear(x_2d, self.w_t, self.b_col, tile_m=tile_m)
        return y_2d.reshape(*lead, self.num_types)

    def forward(self):
        # Reference forward() is `pass` -> returns None.
        return None


if __name__ == "__main__":
    key = jax.random.PRNGKey(0)
    k_mod, k_x1, k_x2, k_x3 = jax.random.split(key, 4)

    d_model, num_types = 768, 1
    mod = HawkesPallas(d_model=d_model, num_types=num_types, key=k_mod)

    # The reference forward() is a no-op:
    assert mod.forward() is None

    def ref_linear(x):
        # Same-precision reference: inputs cast to the module compute dtype,
        # f32 accumulation.
        x32 = x.reshape(-1, d_model).astype(mod.w_t.dtype).astype(jnp.float32)
        w32 = mod.w_t.astype(jnp.float32)
        y = jnp.dot(x32, w32, precision=jax.lax.Precision.HIGHEST) + mod.b_col.T
        return y.reshape(*x.shape[:-1], num_types)

    # Case 1: small aligned shapes (batch=2, seq=8 -> 16 rows, single block).
    x1 = jax.random.normal(k_x1, (2, 8, d_model), jnp.float32)
    y1 = mod.linear(x1)
    jax.block_until_ready(y1)
    assert y1.shape == (2, 8, num_types)
    assert jnp.allclose(y1, ref_linear(x1), atol=1e-4, rtol=1e-4)

    # Case 2: rows not a multiple of 8 (3*5 = 15) -> full-extent (unaligned) block.
    x2 = jax.random.normal(k_x2, (3, 5, d_model), jnp.float32)
    y2 = mod.linear(x2)
    jax.block_until_ready(y2)
    assert y2.shape == (3, 5, num_types)
    assert jnp.allclose(y2, ref_linear(x2), atol=1e-4, rtol=1e-4)

    # Case 3: M = 1400 > 1024 -> multi-step parallel grid with a ragged last
    # block (exercises the no-pad OOB-masked path and 2-TC sharding on v7x).
    x3 = jax.random.normal(k_x3, (2, 700, d_model), jnp.float32)
    y3 = mod.linear(x3)
    jax.block_until_ready(y3)
    assert y3.shape == (2, 700, num_types)
    assert jnp.allclose(y3, ref_linear(x3), atol=1e-4, rtol=1e-4)

    print("KERNEL_OK")
</pallas_src>

<mosaic_0001>
module attributes {stable_mosaic.version = 11 : i64} {
  func.func @_hawkes_linear_kernel(%arg0: i32, %arg1: memref<16x768xf32, #tpu.memory_space<vmem>>, %arg2: memref<768x1xbf16, #tpu.memory_space<vmem>>, %arg3: memref<1x1xf32, #tpu.memory_space<vmem>>, %arg4: memref<1x16xf32, #tpu.memory_space<vmem>>) attributes {dimension_semantics = [#tpu.dimension_semantics<parallel>], iteration_bounds = array<i64: 1>, scalar_prefetch = 0 : i64, scratch_operands = 0 : i64, tpu.core_type = #tpu.core_type<tc>, window_params = [{transform_indices = @transform_0, window_bounds = array<i64: 16, 768>}, {pipeline_mode = #tpu.pipeline_mode<synchronous>, transform_indices = @transform_1, window_bounds = array<i64: 768, 1>}, {pipeline_mode = #tpu.pipeline_mode<synchronous>, transform_indices = @transform_2, window_bounds = array<i64: 1, 1>}, {transform_indices = @transform_3, window_bounds = array<i64: 1, 16>}]} {
    %c0 = arith.constant 0 : index
    %c0_0 = arith.constant 0 : index
    %0 = vector.load %arg1[%c0, %c0_0] : memref<16x768xf32, #tpu.memory_space<vmem>>, vector<16x768xf32>
    %1 = arith.truncf %0 : vector<16x768xf32> to vector<16x768xbf16>
    %c0_1 = arith.constant 0 : index
    %c0_2 = arith.constant 0 : index
    %2 = vector.load %arg2[%c0_1, %c0_2] : memref<768x1xbf16, #tpu.memory_space<vmem>>, vector<768x1xbf16>
    %cst = arith.constant dense<0.000000e+00> : vector<1x16xf32>
    %3 = tpu.matmul %2, %1, %cst {dimension_numbers = #tpu.dot_dimension_numbers<[0], [1], [1], [0], [0, 1, 1, 0], [], []>} : vector<768x1xbf16>, vector<16x768xbf16>, vector<1x16xf32> -> vector<1x16xf32>
    %c0_3 = arith.constant 0 : index
    %c0_4 = arith.constant 0 : index
    %4 = vector.load %arg3[%c0_3, %c0_4] : memref<1x1xf32, #tpu.memory_space<vmem>>, vector<1x1xf32>
    %5 = vector.broadcast %4 : vector<1x1xf32> to vector<1x16xf32>
    %6 = arith.addf %3, %5 : vector<1x16xf32>
    %c0_5 = arith.constant 0 : index
    %c0_6 = arith.constant 0 : index
    %7 = vector.load %arg4[%c0_5, %c0_6] : memref<1x16xf32, #tpu.memory_space<vmem>>, vector<1x16xf32>
    tpu.vector_store %arg4[%c0_5, %c0_6], %6 {strides = array<i32>} : memref<1x16xf32, #tpu.memory_space<vmem>>, vector<1x16xf32>,
    return
  }
  func.func @transform_0(%arg0: i32) -> (i32, i32) {
    %c0_i32 = arith.constant 0 : i32
    %c0_i32_0 = arith.constant 0 : i32
    return %arg0, %c0_i32 : i32, i32
  }
  func.func @transform_1(%arg0: i32) -> (i32, i32) {
    %c0_i32 = arith.constant 0 : i32
    %c0_i32_0 = arith.constant 0 : i32
    %c0_i32_1 = arith.constant 0 : i32
    return %c0_i32, %c0_i32_0 : i32, i32
  }
  func.func @transform_2(%arg0: i32) -> (i32, i32) {
    %c0_i32 = arith.constant 0 : i32
    %c0_i32_0 = arith.constant 0 : i32
    %c0_i32_1 = arith.constant 0 : i32
    return %c0_i32, %c0_i32_0 : i32, i32
  }
  func.func @transform_3(%arg0: i32) -> (i32, i32) {
    %c0_i32 = arith.constant 0 : i32
    %c0_i32_0 = arith.constant 0 : i32
    return %c0_i32, %arg0 : i32, i32
  }
}

</mosaic_0001>

<llo_original>
// kernel: tpu_custom_call.1
$region0: #{tpu_custom_call.1}
  #allocation0 [shape = 'u32[]', space=smem, size = 0x4, offset = 0x4, fixed_abs, tag = 'smem constant byte address 0x4 - core index']
  #allocation1 [shape = 'u32[72,128]{1,0:T(1,128)}', space=vmem, size = 0x9000, scoped, tag = 'internal scratch']
  #allocation2 [shape = 'f32[1,1]{1,0:T(1,128)S(1)}', space=vmem, size = 0x200, scoped, tag = 'scoped memory for tpu_custom_call.1']
  %s0 = inlined_call_operand.vmem [shape: f32[16,768], index: 0, kind: input, shape index: {}]
  %s1 = inlined_call_operand.vmem [shape: bf16[768,1], index: 1, kind: input, shape index: {}]
  %s2 = inlined_call_operand.<no memory space> [shape: f32[1,1], index: 2, kind: input, shape index: {}]
  %s3 = inlined_call_operand.hbm [shape: f32[1,16], index: 3, kind: output, shape index: {}]
  %s4 = sld [smem:[#allocation0]]
  $region22: #{tpu_custom_call.1} parent=0
    _
  %s6 = ssub.s32 1, %s4
  %s7 = scalar_select 0, %s6, %s4
  %v8 = vstv %s2
  %9 = vst [vmem:[#allocation2] sm:$0x1] %v8
  $region1: #{tpu_custom_call.1} parent=0
    #allocation3 [shape = 'u8[512]{0}', space=vmem, size = 0x400, scoped, tag = 'output window, operand 0, single buffered']
    #allocation4 [shape = 's32[1]{0}', space=sflag, size = 0x4, scoped, tag = 'scoped memory for tpu_custom_call.1']
    %10 = vsyncpa [#allocation4], 0
    // Predicated region
    $region2: #{tpu_custom_call.1} parent=1 // pred_check
      _
    $region3: #{tpu_custom_call.1} parent=1 // pred_check_branch
      %12 = sbr.rel (0) target = $region5
    $region4: #{tpu_custom_call.1} parent=1 // pred_region
      _
    $region5: #{tpu_custom_call.1} parent=1 // pred_fallthru
      _
    // Predicated region
    $region6: #{tpu_custom_call.1} parent=1 // pred_check
      _
    $region7: #{tpu_custom_call.1} parent=1 // pred_check_branch
      %14 = sbr.rel (0) target = $region9
    $region8: #{tpu_custom_call.1} parent=1 // pred_region
      _
    $region9: #{tpu_custom_call.1} parent=1 // pred_fallthru
      _
    // Predicated region
    $region10: #{tpu_custom_call.1} parent=1 // pred_check
      _
    $region11: #{tpu_custom_call.1} parent=1 // pred_check_branch
      %16 = sbr.rel (0) target = $region13
    $region12: #{tpu_custom_call.1} parent=1 // pred_region
      _
    $region13: #{tpu_custom_call.1} parent=1 // pred_fallthru
      _
    %v18 = vld [vmem:[%s0] sm:$0xff]
    %v19 = vld [vmem:[%s0 + $0x8] sm:$0xff]
    %v20 = vld [vmem:[%s0 + $0x10] sm:$0xff]
    %v21 = vld [vmem:[%s0 + $0x18] sm:$0xff]
    %v22 = vld [vmem:[%s0 + $0x20] sm:$0xff]
    %v23 = vld [vmem:[%s0 + $0x28] sm:$0xff]
    %v24 = vld [vmem:[%s0 + $0x30] sm:$0xff]
    %v25 = vld [vmem:[%s0 + $0x38] sm:$0xff]
    %v26 = vld [vmem:[%s0 + $0x40] sm:$0xff]
    %v27 = vld [vmem:[%s0 + $0x48] sm:$0xff]
    %v28 = vld [vmem:[%s0 + $0x50] sm:$0xff]
    %v29 = vld [vmem:[%s0 + $0x58] sm:$0xff]
    %v30 = vpack.c.bf16 %v24, %v18
    %v31 = vpack.c.bf16 %v25, %v19
    %v32 = vpack.c.bf16 %v26, %v20
    %v33 = vpack.c.bf16 %v27, %v21
    %v34 = vpack.c.bf16 %v28, %v22
    %v35 = vpack.c.bf16 %v29, %v23
    %v36 = vld [vmem:[%s1] sm:$0xf]
    %v37 = vld [vmem:[%s1 + $0x4] sm:$0xf]
    %v38 = vld [vmem:[%s1 + $0x8] sm:$0xf]
    %v39 = vld [vmem:[%s1 + $0xc] sm:$0xf]
    %v40 = vld [vmem:[%s1 + $0x10] sm:$0xf]
    %v41 = vld [vmem:[%s1 + $0x14] sm:$0xf]
    %v42 = vld [vmem:[%s1 + $0x18] sm:$0xf]
    %v43 = vld [vmem:[%s1 + $0x1c] sm:$0xf]
    %v44 = vld [vmem:[%s1 + $0x20] sm:$0xf]
    %v45 = vld [vmem:[%s1 + $0x24] sm:$0xf]
    %v46 = vld [vmem:[%s1 + $0x28] sm:$0xf]
    %v47 = vld [vmem:[%s1 + $0x2c] sm:$0xf]
    %v48 = vld [vmem:[%s1 + $0x30] sm:$0xf]
    %v49 = vld [vmem:[%s1 + $0x34] sm:$0xf]
    %v50 = vld [vmem:[%s1 + $0x38] sm:$0xf]
    %v51 = vld [vmem:[%s1 + $0x3c] sm:$0xf]
    %v52 = vld [vmem:[%s1 + $0x40] sm:$0xf]
    %v53 = vld [vmem:[%s1 + $0x44] sm:$0xf]
    %v54 = vld [vmem:[%s1 + $0x48] sm:$0xf]
    %v55 = vld [vmem:[%s1 + $0x4c] sm:$0xf]
    %v56 = vld [vmem:[%s1 + $0x50] sm:$0xf]
    %v57 = vld [vmem:[%s1 + $0x54] sm:$0xf]
    %v58 = vld [vmem:[%s1 + $0x58] sm:$0xf]
    %v59 = vld [vmem:[%s1 + $0x5c] sm:$0xf]
    %v60 = vld [vmem:[%s1 + $0x60] sm:$0xf]
    %v61 = vld [vmem:[%s1 + $0x64] sm:$0xf]
    %v62 = vld [vmem:[%s1 + $0x68] sm:$0xf]
    %v63 = vld [vmem:[%s1 + $0x6c] sm:$0xf]
    %v64 = vld [vmem:[%s1 + $0x70] sm:$0xf]
    %v65 = vld [vmem:[%s1 + $0x74] sm:$0xf]
    %v66 = vld [vmem:[%s1 + $0x78] sm:$0xf]
    %v67 = vld [vmem:[%s1 + $0x7c] sm:$0xf]
    %v68 = vld [vmem:[%s1 + $0x80] sm:$0xf]
    %v69 = vld [vmem:[%s1 + $0x84] sm:$0xf]
    %v70 = vld [vmem:[%s1 + $0x88] sm:$0xf]
    %v71 = vld [vmem:[%s1 + $0x8c] sm:$0xf]
    %v72 = vld [vmem:[%s1 + $0x90] sm:$0xf]
    %v73 = vld [vmem:[%s1 + $0x94] sm:$0xf]
    %v74 = vld [vmem:[%s1 + $0x98] sm:$0xf]
    %v75 = vld [vmem:[%s1 + $0x9c] sm:$0xf]
    %v76 = vld [vmem:[%s1 + $0xa0] sm:$0xf]
    %v77 = vld [vmem:[%s1 + $0xa4] sm:$0xf]
    %v78 = vld [vmem:[%s1 + $0xa8] sm:$0xf]
    %v79 = vld [vmem:[%s1 + $0xac] sm:$0xf]
    %v80 = vld [vmem:[%s1 + $0xb0] sm:$0xf]
    %v81 = vld [vmem:[%s1 + $0xb4] sm:$0xf]
    %v82 = vld [vmem:[%s1 + $0xb8] sm:$0xf]
    %v83 = vld [vmem:[%s1 + $0xbc] sm:$0xf]
    %v84 = vld [vmem:[%s1 + $0xc0] sm:$0xf]
    %v85 = vld [vmem:[%s1 + $0xc4] sm:$0xf]
    %v86 = vld [vmem:[%s1 + $0xc8] sm:$0xf]
    %v87 = vld [vmem:[%s1 + $0xcc] sm:$0xf]
    %v88 = vld [vmem:[%s1 + $0xd0] sm:$0xf]
    %v89 = vld [vmem:[%s1 + $0xd4] sm:$0xf]
    %v90 = vld [vmem:[%s1 + $0xd8] sm:$0xf]
    %v91 = vld [vmem:[%s1 + $0xdc] sm:$0xf]
    %v92 = vld [vmem:[%s1 + $0xe0] sm:$0xf]
    %v93 = vld [vmem:[%s1 + $0xe4] sm:$0xf]
    %v94 = vld [vmem:[%s1 + $0xe8] sm:$0xf]
    %v95 = vld [vmem:[%s1 + $0xec] sm:$0xf]
    %v96 = vld [vmem:[%s1 + $0xf0] sm:$0xf]
    %v97 = vld [vmem:[%s1 + $0xf4] sm:$0xf]
    %v98 = vld [vmem:[%s1 + $0xf8] sm:$0xf]
    %v99 = vld [vmem:[%s1 + $0xfc] sm:$0xf]
    %v100 = vld [vmem:[%s1 + $0x100] sm:$0xf]
    %v101 = vld [vmem:[%s1 + $0x104] sm:$0xf]
    %v102 = vld [vmem:[%s1 + $0x108] sm:$0xf]
    %v103 = vld [vmem:[%s1 + $0x10c] sm:$0xf]
    %v104 = vld [vmem:[%s1 + $0x110] sm:$0xf]
    %v105 = vld [vmem:[%s1 + $0x114] sm:$0xf]
    %v106 = vld [vmem:[%s1 + $0x118] sm:$0xf]
    %v107 = vld [vmem:[%s1 + $0x11c] sm:$0xf]
    %v108 = vld [vmem:[%s1 + $0x120] sm:$0xf]
    %v109 = vld [vmem:[%s1 + $0x124] sm:$0xf]
    %v110 = vld [vmem:[%s1 + $0x128] sm:$0xf]
    %v111 = vld [vmem:[%s1 + $0x12c] sm:$0xf]
    %v112 = vld [vmem:[%s1 + $0x130] sm:$0xf]
    %v113 = vld [vmem:[%s1 + $0x134] sm:$0xf]
    %v114 = vld [vmem:[%s1 + $0x138] sm:$0xf]
    %v115 = vld [vmem:[%s1 + $0x13c] sm:$0xf]
    %v116 = vld [vmem:[%s1 + $0x140] sm:$0xf]
    %v117 = vld [vmem:[%s1 + $0x144] sm:$0xf]
    %v118 = vld [vmem:[%s1 + $0x148] sm:$0xf]
    %v119 = vld [vmem:[%s1 + $0x14c] sm:$0xf]
    %v120 = vld [vmem:[%s1 + $0x150] sm:$0xf]
    %v121 = vld [vmem:[%s1 + $0x154] sm:$0xf]
    %v122 = vld [vmem:[%s1 + $0x158] sm:$0xf]
    %v123 = vld [vmem:[%s1 + $0x15c] sm:$0xf]
    %v124 = vld [vmem:[%s1 + $0x160] sm:$0xf]
    %v125 = vld [vmem:[%s1 + $0x164] sm:$0xf]
    %v126 = vld [vmem:[%s1 + $0x168] sm:$0xf]
    %v127 = vld [vmem:[%s1 + $0x16c] sm:$0xf]
    %v128 = vld [vmem:[%s1 + $0x170] sm:$0xf]
    %v129 = vld [vmem:[%s1 + $0x174] sm:$0xf]
    %v130 = vld [vmem:[%s1 + $0x178] sm:$0xf]
    %v131 = vld [vmem:[%s1 + $0x17c] sm:$0xf]
    %v132 = vld [vmem:[#allocation2] sm:$0x1]
    %134 = vset.pattern.permute.xlu0 0
    %135 = vperm.xlu0 %134, %v132
    %v136 = vpop.permute.xlu0 %135
    %v138 = vperm.slane %v136, 0
    %v235 = vunpack.c.l.b16 %v36
    %v236 = vunpack.c.l.b16 %v37
    %v237 = vunpack.c.l.b16 %v38
    %v238 = vunpack.c.l.b16 %v39
    %v239 = vunpack.c.l.b16 %v40
    %v240 = vunpack.c.l.b16 %v41
    %v241 = vunpack.c.l.b16 %v42
    %v242 = vunpack.c.l.b16 %v43
    %v243 = vunpack.c.l.b16 %v44
    %v244 = vunpack.c.l.b16 %v45
    %v245 = vunpack.c.l.b16 %v46
    %v246 = vunpack.c.l.b16 %v47
    %v247 = vunpack.c.l.b16 %v48
    %v248 = vunpack.c.l.b16 %v49
    %v249 = vunpack.c.l.b16 %v50
    %v250 = vunpack.c.l.b16 %v51
    %v251 = vunpack.c.l.b16 %v52
    %v252 = vunpack.c.l.b16 %v53
    %v253 = vunpack.c.l.b16 %v54
    %v254 = vunpack.c.l.b16 %v55
    %v255 = vunpack.c.l.b16 %v56
    %v256 = vunpack.c.l.b16 %v57
    %v257 = vunpack.c.l.b16 %v58
    %v258 = vunpack.c.l.b16 %v59
    %v259 = vunpack.c.l.b16 %v60
    %v260 = vunpack.c.l.b16 %v61
    %v261 = vunpack.c.l.b16 %v62
    %v262 = vunpack.c.l.b16 %v63
    %v263 = vunpack.c.l.b16 %v64
    %v264 = vunpack.c.l.b16 %v65
    %v265 = vunpack.c.l.b16 %v66
    %v266 = vunpack.c.l.b16 %v67
    %v267 = vunpack.c.l.b16 %v68
    %v268 = vunpack.c.l.b16 %v69
    %v269 = vunpack.c.l.b16 %v70
    %v270 = vunpack.c.l.b16 %v71
    %v271 = vunpack.c.l.b16 %v72
    %v272 = vunpack.c.l.b16 %v73
    %v273 = vunpack.c.l.b16 %v74
    %v274 = vunpack.c.l.b16 %v75
    %v275 = vunpack.c.l.b16 %v76
    %v276 = vunpack.c.l.b16 %v77
    %v277 = vunpack.c.l.b16 %v78
    %v278 = vunpack.c.l.b16 %v79
    %v279 = vunpack.c.l.b16 %v80
    %v280 = vunpack.c.l.b16 %v81
    %v281 = vunpack.c.l.b16 %v82
    %v282 = vunpack.c.l.b16 %v83
    %v283 = vunpack.c.l.b16 %v84
    %v284 = vunpack.c.l.b16 %v85
    %v285 = vunpack.c.l.b16 %v86
    %v286 = vunpack.c.l.b16 %v87
    %v287 = vunpack.c.l.b16 %v88
    %v288 = vunpack.c.l.b16 %v89
    %v289 = vunpack.c.l.b16 %v90
    %v290 = vunpack.c.l.b16 %v91
    %v291 = vunpack.c.l.b16 %v92
    %v292 = vunpack.c.l.b16 %v93
    %v293 = vunpack.c.l.b16 %v94
    %v294 = vunpack.c.l.b16 %v95
    %v295 = vunpack.c.l.b16 %v96
    %v296 = vunpack.c.l.b16 %v97
    %v297 = vunpack.c.l.b16 %v98
    %v298 = vunpack.c.l.b16 %v99
    %v299 = vunpack.c.l.b16 %v100
    %v300 = vunpack.c.l.b16 %v101
    %v301 = vunpack.c.l.b16 %v102
    %v302 = vunpack.c.l.b16 %v103
    %v303 = vunpack.c.l.b16 %v104
    %v304 = vunpack.c.l.b16 %v105
    %v305 = vunpack.c.l.b16 %v106
    %v306 = vunpack.c.l.b16 %v107
    %v307 = vunpack.c.l.b16 %v108
    %v308 = vunpack.c.l.b16 %v109
    %v309 = vunpack.c.l.b16 %v110
    %v310 = vunpack.c.l.b16 %v111
    %v311 = vunpack.c.l.b16 %v112
    %v312 = vunpack.c.l.b16 %v113
    %v313 = vunpack.c.l.b16 %v114
    %v314 = vunpack.c.l.b16 %v115
    %v315 = vunpack.c.l.b16 %v116
    %v316 = vunpack.c.l.b16 %v117
    %v317 = vunpack.c.l.b16 %v118
    %v318 = vunpack.c.l.b16 %v119
    %v319 = vunpack.c.l.b16 %v120
    %v320 = vunpack.c.l.b16 %v121
    %v321 = vunpack.c.l.b16 %v122
    %v322 = vunpack.c.l.b16 %v123
    %v323 = vunpack.c.l.b16 %v124
    %v324 = vunpack.c.l.b16 %v125
    %v325 = vunpack.c.l.b16 %v126
    %v326 = vunpack.c.l.b16 %v127
    %v327 = vunpack.c.l.b16 %v128
    %v328 = vunpack.c.l.b16 %v129
    %v329 = vunpack.c.l.b16 %v130
    %v330 = vunpack.c.l.b16 %v131
    %v331 = vpack.c.b16 %v236, %v235
    %v332 = vpack.c.b16 %v238, %v237
    %v333 = vpack.c.b16 %v240, %v239
    %v334 = vpack.c.b16 %v242, %v241
    %v335 = vpack.c.b16 %v244, %v243
    %v336 = vpack.c.b16 %v246, %v245
    %v337 = vpack.c.b16 %v248, %v247
    %v338 = vpack.c.b16 %v250, %v249
    %v339 = vpack.c.b16 %v252, %v251
    %v340 = vpack.c.b16 %v254, %v253
    %v341 = vpack.c.b16 %v256, %v255
    %v342 = vpack.c.b16 %v258, %v257
    %v343 = vpack.c.b16 %v260, %v259
    %v344 = vpack.c.b16 %v262, %v261
    %v345 = vpack.c.b16 %v264, %v263
    %v346 = vpack.c.b16 %v266, %v265
    %v347 = vpack.c.b16 %v268, %v267
    %v348 = vpack.c.b16 %v270, %v269
    %v349 = vpack.c.b16 %v272, %v271
    %v350 = vpack.c.b16 %v274, %v273
    %v351 = vpack.c.b16 %v276, %v275
    %v352 = vpack.c.b16 %v278, %v277
    %v353 = vpack.c.b16 %v280, %v279
    %v354 = vpack.c.b16 %v282, %v281
    %v355 = vpack.c.b16 %v284, %v283
    %v356 = vpack.c.b16 %v286, %v285
    %v357 = vpack.c.b16 %v288, %v287
    %v358 = vpack.c.b16 %v290, %v289
    %v359 = vpack.c.b16 %v292, %v291
    %v360 = vpack.c.b16 %v294, %v293
    %v361 = vpack.c.b16 %v296, %v295
    %v362 = vpack.c.b16 %v298, %v297
    %v363 = vpack.c.b16 %v300, %v299
    %v364 = vpack.c.b16 %v302, %v301
    %v365 = vpack.c.b16 %v304, %v303
    %v366 = vpack.c.b16 %v306, %v305
    %v367 = vpack.c.b16 %v308, %v307
    %v368 = vpack.c.b16 %v310, %v309
    %v369 = vpack.c.b16 %v312, %v311
    %v370 = vpack.c.b16 %v314, %v313
    %v371 = vpack.c.b16 %v316, %v315
    %v372 = vpack.c.b16 %v318, %v317
    %v373 = vpack.c.b16 %v320, %v319
    %v374 = vpack.c.b16 %v322, %v321
    %v375 = vpack.c.b16 %v324, %v323
    %v376 = vpack.c.b16 %v326, %v325
    %v377 = vpack.c.b16 %v328, %v327
    %v378 = vpack.c.b16 %v330, %v329
    %427 = vxpose.xlu0.c.b16.start [1/8] %v331, 128
    %428 = vxpose.xlu0.c.b16.cont [2/8] %v332, 128
    %429 = vxpose.xlu0.c.b16.cont [3/8] %v333, 128
    %430 = vxpose.xlu0.c.b16.cont [4/8] %v334, 128
    %431 = vxpose.xlu0.c.b16.cont [5/8] %v335, 128
    %432 = vxpose.xlu0.c.b16.cont [6/8] %v336, 128
    %433 = vxpose.xlu0.c.b16.cont [7/8] %v337, 128
    %434 = vxpose.xlu0.c.b16.end [8/8] %v338, 128
    %v435 = vpop.trf.xlu0
    %v436 = vpop.trf.xlu0
    %v437 = vpop.trf.xlu0
    %v438 = vpop.trf.xlu0
    %v439 = vpop.trf.xlu0
    %v440 = vpop.trf.xlu0
    %v441 = vpop.trf.xlu0
    %v442 = vpop.trf.xlu0
    %443 = vxpose.xlu0.c.b16.start [1/8] %v339, 128
    %444 = vxpose.xlu0.c.b16.cont [2/8] %v340, 128
    %445 = vxpose.xlu0.c.b16.cont [3/8] %v341, 128
    %446 = vxpose.xlu0.c.b16.cont [4/8] %v342, 128
    %447 = vxpose.xlu0.c.b16.cont [5/8] %v343, 128
    %448 = vxpose.xlu0.c.b16.cont [6/8] %v344, 128
    %449 = vxpose.xlu0.c.b16.cont [7/8] %v345, 128
    %450 = vxpose.xlu0.c.b16.end [8/8] %v346, 128
    %v451 = vpop.trf.xlu0
    %v452 = vpop.trf.xlu0
    %v453 = vpop.trf.xlu0
    %v454 = vpop.trf.xlu0
    %v455 = vpop.trf.xlu0
    %v456 = vpop.trf.xlu0
    %v457 = vpop.trf.xlu0
    %v458 = vpop.trf.xlu0
    %459 = vxpose.xlu0.c.b16.start [1/8] %v347, 128
    %460 = vxpose.xlu0.c.b16.cont [2/8] %v348, 128
    %461 = vxpose.xlu0.c.b16.cont [3/8] %v349, 128
    %462 = vxpose.xlu0.c.b16.cont [4/8] %v350, 128
    %463 = vxpose.xlu0.c.b16.cont [5/8] %v351, 128
    %464 = vxpose.xlu0.c.b16.cont [6/8] %v352, 128
    %465 = vxpose.xlu0.c.b16.cont [7/8] %v353, 128
    %466 = vxpose.xlu0.c.b16.end [8/8] %v354, 128
    %v467 = vpop.trf.xlu0
    %v468 = vpop.trf.xlu0
    %v469 = vpop.trf.xlu0
    %v470 = vpop.trf.xlu0
    %v471 = vpop.trf.xlu0
    %v472 = vpop.trf.xlu0
    %v473 = vpop.trf.xlu0
    %v474 = vpop.trf.xlu0
    %475 = vxpose.xlu0.c.b16.start [1/8] %v355, 128
    %476 = vxpose.xlu0.c.b16.cont [2/8] %v356, 128
    %477 = vxpose.xlu0.c.b16.cont [3/8] %v357, 128
    %478 = vxpose.xlu0.c.b16.cont [4/8] %v358, 128
    %479 = vxpose.xlu0.c.b16.cont [5/8] %v359, 128
    %480 = vxpose.xlu0.c.b16.cont [6/8] %v360, 128
    %481 = vxpose.xlu0.c.b16.cont [7/8] %v361, 128
    %482 = vxpose.xlu0.c.b16.end [8/8] %v362, 128
    %v483 = vpop.trf.xlu0
    %v484 = vpop.trf.xlu0
    %v485 = vpop.trf.xlu0
    %v486 = vpop.trf.xlu0
    %v487 = vpop.trf.xlu0
    %v488 = vpop.trf.xlu0
    %v489 = vpop.trf.xlu0
    %v490 = vpop.trf.xlu0
    %491 = vxpose.xlu0.c.b16.start [1/8] %v363, 128
    %492 = vxpose.xlu0.c.b16.cont [2/8] %v364, 128
    %493 = vxpose.xlu0.c.b16.cont [3/8] %v365, 128
    %494 = vxpose.xlu0.c.b16.cont [4/8] %v366, 128
    %495 = vxpose.xlu0.c.b16.cont [5/8] %v367, 128
    %496 = vxpose.xlu0.c.b16.cont [6/8] %v368, 128
    %497 = vxpose.xlu0.c.b16.cont [7/8] %v369, 128
    %498 = vxpose.xlu0.c.b16.end [8/8] %v370, 128
    %v499 = vpop.trf.xlu0
    %v500 = vpop.trf.xlu0
    %v501 = vpop.trf.xlu0
    %v502 = vpop.trf.xlu0
    %v503 = vpop.trf.xlu0
    %v504 = vpop.trf.xlu0
    %v505 = vpop.trf.xlu0
    %v506 = vpop.trf.xlu0
    %507 = vxpose.xlu0.c.b16.start [1/8] %v371, 128
    %508 = vxpose.xlu0.c.b16.cont [2/8] %v372, 128
    %509 = vxpose.xlu0.c.b16.cont [3/8] %v373, 128
    %510 = vxpose.xlu0.c.b16.cont [4/8] %v374, 128
    %511 = vxpose.xlu0.c.b16.cont [5/8] %v375, 128
    %512 = vxpose.xlu0.c.b16.cont [6/8] %v376, 128
    %513 = vxpose.xlu0.c.b16.cont [7/8] %v377, 128
    %514 = vxpose.xlu0.c.b16.end [8/8] %v378, 128
    %v515 = vpop.trf.xlu0
    %v516 = vpop.trf.xlu0
    %v517 = vpop.trf.xlu0
    %v518 = vpop.trf.xlu0
    %v519 = vpop.trf.xlu0
    %v520 = vpop.trf.xlu0
    %v521 = vpop.trf.xlu0
    %v522 = vpop.trf.xlu0
    %523 = vmatpush.bf16.xpose.msra.mxu0 0
    %524 = vmatpush.bf16.xpose.msra.mxu0 0
    %525 = vmatpush.bf16.xpose.msra.mxu0 0
    %526 = vmatpush.bf16.xpose.msra.mxu0 0
    %527 = vmatpush.bf16.xpose.msra.mxu0 0
    %528 = vmatpush.bf16.xpose.msra.mxu0 0
    %529 = vmatpush.bf16.xpose.msra.mxu0 0
    %530 = vmatpush.bf16.xpose.msra.mxu0 %v30
    %531 = vmatmul.bf16.gmra.mxu0 %v435
    %v532 = vpop.f32.mrf.mxu0
    %v533 = vadd.f32 %v138, %v532
    %v534 = vpop.f32.mrf.mxu0
    %535 = vdwg.mxu0
    %536 = vmatpush.bf16.xpose.msra.mxu0 0
    %537 = vmatpush.bf16.xpose.msra.mxu0 0
    %538 = vmatpush.bf16.xpose.msra.mxu0 0
    %539 = vmatpush.bf16.xpose.msra.mxu0 0
    %540 = vmatpush.bf16.xpose.msra.mxu0 0
    %541 = vmatpush.bf16.xpose.msra.mxu0 0
    %542 = vmatpush.bf16.xpose.msra.mxu0 0
    %543 = vmatpush.bf16.xpose.msra.mxu0 %v31
    %544 = vmatmul.bf16.gmra.mxu0 %v451
    %v545 = vpop.f32.mrf.mxu0
    %v546 = vadd.f32 %v533, %v545
    %v547 = vpop.f32.mrf.mxu0
    %548 = vdwg.mxu0
    %549 = vmatpush.bf16.xpose.msra.mxu0 0
    %550 = vmatpush.bf16.xpose.msra.mxu0 0
    %551 = vmatpush.bf16.xpose.msra.mxu0 0
    %552 = vmatpush.bf16.xpose.msra.mxu0 0
    %553 = vmatpush.bf16.xpose.msra.mxu0 0
    %554 = vmatpush.bf16.xpose.msra.mxu0 0
    %555 = vmatpush.bf16.xpose.msra.mxu0 0
    %556 = vmatpush.bf16.xpose.msra.mxu0 %v32
    %557 = vmatmul.bf16.gmra.mxu0 %v467
    %v558 = vpop.f32.mrf.mxu0
    %v559 = vadd.f32 %v546, %v558
    %v560 = vpop.f32.mrf.mxu0
    %561 = vdwg.mxu0
    %562 = vmatpush.bf16.xpose.msra.mxu0 0
    %563 = vmatpush.bf16.xpose.msra.mxu0 0
    %564 = vmatpush.bf16.xpose.msra.mxu0 0
    %565 = vmatpush.bf16.xpose.msra.mxu0 0
    %566 = vmatpush.bf16.xpose.msra.mxu0 0
    %567 = vmatpush.bf16.xpose.msra.mxu0 0
    %568 = vmatpush.bf16.xpose.msra.mxu0 0
    %569 = vmatpush.bf16.xpose.msra.mxu0 %v33
    %570 = vmatmul.bf16.gmra.mxu0 %v483
    %v571 = vpop.f32.mrf.mxu0
    %v572 = vadd.f32 %v559, %v571
    %v573 = vpop.f32.mrf.mxu0
    %574 = vdwg.mxu0
    %575 = vmatpush.bf16.xpose.msra.mxu0 0
    %576 = vmatpush.bf16.xpose.msra.mxu0 0
    %577 = vmatpush.bf16.xpose.msra.mxu0 0
    %578 = vmatpush.bf16.xpose.msra.mxu0 0
    %579 = vmatpush.bf16.xpose.msra.mxu0 0
    %580 = vmatpush.bf16.xpose.msra.mxu0 0
    %581 = vmatpush.bf16.xpose.msra.mxu0 0
    %582 = vmatpush.bf16.xpose.msra.mxu0 %v34
    %583 = vmatmul.bf16.gmra.mxu0 %v499
    %v584 = vpop.f32.mrf.mxu0
    %v585 = vadd.f32 %v572, %v584
    %v586 = vpop.f32.mrf.mxu0
    %587 = vdwg.mxu0
    %588 = vmatpush.bf16.xpose.msra.mxu0 0
    %589 = vmatpush.bf16.xpose.msra.mxu0 0
    %590 = vmatpush.bf16.xpose.msra.mxu0 0
    %591 = vmatpush.bf16.xpose.msra.mxu0 0
    %592 = vmatpush.bf16.xpose.msra.mxu0 0
    %593 = vmatpush.bf16.xpose.msra.mxu0 0
    %594 = vmatpush.bf16.xpose.msra.mxu0 0
    %595 = vmatpush.bf16.xpose.msra.mxu0 %v35
    %596 = vmatmul.bf16.gmra.mxu0 %v515
    %v597 = vpop.f32.mrf.mxu0
    %v598 = vadd.f32 %v585, %v597
    %v599 = vpop.f32.mrf.mxu0
    %600 = vdwg.mxu0
    %vm601 = vcmask 122880
    %602 = vst.msk [vmem:[#allocation3] sm:$0x1] %vm601, %v598
    // Predicated region
    $region14: #{tpu_custom_call.1} parent=1 // pred_check
      _
    $region15: #{tpu_custom_call.1} parent=1 // pred_check_branch
      %604 = sbr.rel (0) target = $region17
    $region16: #{tpu_custom_call.1} parent=1 // pred_region
      %606 = vsyncadd [#allocation4], 0
      %s608 = sshll.u32 [#allocation3], 4
      %s609 = int_to_ptr.vmem [resolvable:$true] %s608
      %s610 = sshll.u32 %s3, 4
      %s611 = int_to_ptr.hbm [resolvable:$true] %s610
      %613 = dma.vmem_to_hbm [thread:$0]  %s609, 16, %s611, [#allocation4]
    $region17: #{tpu_custom_call.1} parent=1 // pred_fallthru
      _
    // Predicated region
    $region18: #{tpu_custom_call.1} parent=1 // pred_check
      _
    $region19: #{tpu_custom_call.1} parent=1 // pred_check_branch
      %615 = sbr.rel (0) target = $region21
    $region20: #{tpu_custom_call.1} parent=1 // pred_region
      %617 = dma.done [#allocation4], 16
    $region21: #{tpu_custom_call.1} parent=1 // pred_fallthru
      _
    %618 = vsyncpa [#allocation4], 1

</llo_original>
